<compile_context>
chip_gen: v7x
topology: tpu7x:2x2x1
jax: 0.10.0
libtpu: 0.0.40
codegen_flags: <defaults>
</compile_context>

<pallas_src>
import functools

import jax
import jax.numpy as jnp
from jax.experimental import pallas as pl
from jax.experimental.pallas import tpu as pltpu

LANE = 128  # lane-dense padded width for hidden / class channels


def _round_up(v, m):
    return (v + m - 1) // m * m


def gcn_fused_kernel(a_ref, x_ref, w1_ref, b1_ref, w2_ref, b2_ref,
                     o_ref, xw_ref, h1_ref, *, tile_m):
    phase = pl.program_id(0)   # 0 = layer 1, 1 = layer 2
    row = pl.program_id(1)     # row tile of the aggregation

    # Feature transform, computed once per layer at the first row step.
    @pl.when(jnp.logical_and(phase == 0, row == 0))
    def _():
        xw_ref[...] = jnp.dot(
            x_ref[...], w1_ref[...], preferred_element_type=jnp.float32
        ).astype(xw_ref.dtype)

    @pl.when(jnp.logical_and(phase == 1, row == 0))
    def _():
        # Layer-2 transform needs all of H1, which phase 0 fully produced.
        xw_ref[...] = jnp.dot(
            h1_ref[...], w2_ref[...], preferred_element_type=jnp.float32
        ).astype(xw_ref.dtype)

    # Neighborhood aggregation for this row tile, slicing the VMEM-resident A.
    start = pl.multiple_of(row * tile_m, tile_m)
    a_rows = a_ref[pl.ds(start, tile_m), :]                       # (TM, N) bf16
    agg = jnp.dot(a_rows, xw_ref[...], preferred_element_type=jnp.float32)

    @pl.when(phase == 0)
    def _():
        # Bias + ReLU; stays in VMEM scratch, never touches HBM.
        h1 = jnp.maximum(agg + b1_ref[...], 0.0)
        h1_ref[pl.ds(start, tile_m), :] = h1.astype(h1_ref.dtype)
        # o_ref intentionally untouched: the phase-aware output index_map keeps
        # the output block frozen during phase 0, so nothing is written back
        # until phase 1 fully overwrites each tile.

    @pl.when(phase == 1)
    def _():
        # Layer 2: bias only (no ReLU); dropout is identity in eval mode.
        o_ref[...] = (agg + b2_ref[...]).astype(o_ref.dtype)


def gcn_fused(a_hat, x, w1, b1, w2, b2, *, tile_m=128):
    """Fused 2-layer GCN forward. Returns logits [N, num_classes] in f32."""
    n = a_hat.shape[0]
    f_in = x.shape[1]
    hidden = w1.shape[1]
    n_cls = w2.shape[1]

    n_pad = _round_up(n, tile_m)
    f_pad = _round_up(f_in, LANE)

    # Zero-pad to TPU-friendly shapes and cast the big operands to bf16.
    a_p = jnp.zeros((n_pad, n_pad), jnp.bfloat16).at[:n, :n].set(
        a_hat.astype(jnp.bfloat16))
    x_p = jnp.zeros((n_pad, f_pad), jnp.bfloat16).at[:n, :f_in].set(
        x.astype(jnp.bfloat16))
    w1_p = jnp.zeros((f_pad, LANE), jnp.bfloat16).at[:f_in, :hidden].set(
        w1.astype(jnp.bfloat16))
    b1_p = jnp.zeros((1, LANE), jnp.float32).at[:, :hidden].set(b1.reshape(1, -1))
    w2_p = jnp.zeros((LANE, LANE), jnp.bfloat16).at[:hidden, :n_cls].set(
        w2.astype(jnp.bfloat16))
    b2_p = jnp.zeros((1, LANE), jnp.float32).at[:, :n_cls].set(b2.reshape(1, -1))

    n_row_tiles = n_pad // tile_m
    grid = (2, n_row_tiles)   # (layer phase, row tile)

    out_padded = pl.pallas_call(
        functools.partial(gcn_fused_kernel, tile_m=tile_m),
        out_shape=jax.ShapeDtypeStruct((n_pad, LANE), jnp.float32),
        grid_spec=pltpu.PrefetchScalarGridSpec(
            num_scalar_prefetch=0,
            grid=grid,
            in_specs=[
                # Constant block index => A_hat is DMA'd once and stays resident.
                pl.BlockSpec((n_pad, n_pad), lambda p, i: (0, 0)),
                pl.BlockSpec((n_pad, f_pad), lambda p, i: (0, 0)),
                pl.BlockSpec((f_pad, LANE), lambda p, i: (0, 0)),
                pl.BlockSpec((1, LANE), lambda p, i: (0, 0)),
                pl.BlockSpec((LANE, LANE), lambda p, i: (0, 0)),
                pl.BlockSpec((1, LANE), lambda p, i: (0, 0)),
            ],
            # Phase-aware map: block frozen at 0 during phase 0 (never written
            # back), real row tile during phase 1.  Lane-dense 128-wide tiles.
            out_specs=pl.BlockSpec((tile_m, LANE), lambda p, i: (i * p, 0)),
            scratch_shapes=[
                pltpu.VMEM((n_pad, LANE), jnp.bfloat16),  # XW1 / H1@W2 (per phase)
                pltpu.VMEM((n_pad, LANE), jnp.bfloat16),  # H1 (layer-1 activations)
            ],
        ),
        compiler_params=pltpu.CompilerParams(
            # Cross-row dependence through the H1/XW scratches forces sequential
            # execution of both axes (see header note on the megacore trade-off).
            dimension_semantics=("arbitrary", "arbitrary"),
            vmem_limit_bytes=32 * 1024 * 1024,
        ),
    )(a_p, x_p, w1_p, b1_p, w2_p, b2_p)

    return out_padded[:n, :n_cls]


def build_normalized_adjacency(edge_index, num_nodes):
    """Dense D^-1/2 (A + I) D^-1/2, matching PyG GCNConv's gcn_norm.

    Duplicate edges accumulate (gcn_norm sums per-edge weights) and self-loops
    are only added for nodes lacking one (add_remaining_self_loops semantics).
    Built once outside the jitted forward for a static graph.
    """
    src, dst = edge_index[0], edge_index[1]
    a = jnp.zeros((num_nodes, num_nodes), jnp.float32)
    # row = target node (receives messages), col = source node
    a = a.at[dst, src].add(1.0)
    idx = jnp.arange(num_nodes)
    diag = jnp.diagonal(a)
    a = a.at[idx, idx].set(jnp.where(diag > 0.0, diag, 1.0))
    deg = a.sum(axis=1)
    d_inv_sqrt = jnp.where(deg > 0.0, jax.lax.rsqrt(deg), 0.0)
    return d_inv_sqrt[:, None] * a * d_inv_sqrt[None, :]


def glorot(key, shape):
    fan_in, fan_out = shape
    limit = jnp.sqrt(6.0 / (fan_in + fan_out))
    return jax.random.uniform(key, shape, jnp.float32, -limit, limit)


def reference_forward(a_hat, x, w1, b1, w2, b2):
    """Plain-JAX reference mirroring the kernel's bf16 storage / f32 accumulate."""
    bf = jnp.bfloat16
    a_b = a_hat.astype(bf)
    xw1 = jnp.dot(x.astype(bf), w1.astype(bf),
                  preferred_element_type=jnp.float32).astype(bf)
    h1 = jnp.maximum(
        jnp.dot(a_b, xw1, preferred_element_type=jnp.float32) + b1, 0.0
    ).astype(bf)
    hw2 = jnp.dot(h1, w2.astype(bf),
                  preferred_element_type=jnp.float32).astype(bf)
    return jnp.dot(a_b, hw2, preferred_element_type=jnp.float32) + b2


if __name__ == "__main__":
    # Small synthetic "Cora-like" problem; sizes deliberately NOT multiples of
    # 8/128 to exercise the padding path.
    N = 200             # number of nodes
    NUM_FEATURES = 96   # dataset.num_features
    HIDDEN = 32         # hidden_channels
    NUM_CLASSES = 7     # dataset.num_classes
    NUM_EDGES = 800

    key = jax.random.PRNGKey(0)
    k_x, k_e1, k_e2, k_w1, k_w2 = jax.random.split(key, 5)

    # Node features (row-normalized, mimicking NormalizeFeatures()).
    x = jax.random.uniform(k_x, (N, NUM_FEATURES), jnp.float32)
    x = x / jnp.maximum(x.sum(axis=1, keepdims=True), 1e-12)

    # Random directed edge_index [2, E]; made symmetric like Cora's undirected graph.
    src = jax.random.randint(k_e1, (NUM_EDGES,), 0, N)
    dst = jax.random.randint(k_e2, (NUM_EDGES,), 0, N)
    edge_index = jnp.stack(
        [jnp.concatenate([src, dst]), jnp.concatenate([dst, src])], axis=0
    ).astype(jnp.int32)

    # Deterministic parameter init (GCNConv: glorot weight, zero bias).
    params = {
        "w1": glorot(k_w1, (NUM_FEATURES, HIDDEN)),
        "b1": jnp.zeros((HIDDEN,), jnp.float32),
        "w2": glorot(k_w2, (HIDDEN, NUM_CLASSES)),
        "b2": jnp.zeros((NUM_CLASSES,), jnp.float32),
    }

    # Static graph: precompute A_hat ONCE, outside the jitted forward.
    a_hat = build_normalized_adjacency(edge_index, N)

    forward = jax.jit(
        lambda a, feats, p: gcn_fused(a, feats, p["w1"], p["b1"], p["w2"], p["b2"])
    )
    out = jax.block_until_ready(forward(a_hat, x, params))

    ref = reference_forward(a_hat, x, params["w1"], params["b1"],
                            params["w2"], params["b2"])

    assert out.shape == (N, NUM_CLASSES), out.shape
    assert jnp.allclose(out, ref, atol=2e-3, rtol=2e-2), (
        "max abs err = %f" % float(jnp.max(jnp.abs(out - ref)))
    )

    print("KERNEL_OK")
</pallas_src>

<mosaic_0001>
module attributes {stable_mosaic.version = 11 : i64} {
  func.func @gcn_fused_kernel(%arg0: i32, %arg1: i32, %arg2: memref<256x256xbf16, #tpu.memory_space<vmem>>, %arg3: memref<256x128xbf16, #tpu.memory_space<vmem>>, %arg4: memref<128x128xbf16, #tpu.memory_space<vmem>>, %arg5: memref<1x128xf32, #tpu.memory_space<vmem>>, %arg6: memref<128x128xbf16, #tpu.memory_space<vmem>>, %arg7: memref<1x128xf32, #tpu.memory_space<vmem>>, %arg8: memref<128x128xf32, #tpu.memory_space<vmem>>, %arg9: memref<256x128xbf16, #tpu.memory_space<vmem>>, %arg10: memref<256x128xbf16, #tpu.memory_space<vmem>>) attributes {dimension_semantics = [#tpu.dimension_semantics<arbitrary>, #tpu.dimension_semantics<arbitrary>], iteration_bounds = array<i64: 2, 2>, scalar_prefetch = 0 : i64, scratch_operands = 2 : i64, tpu.core_type = #tpu.core_type<tc>, window_params = [{pipeline_mode = #tpu.pipeline_mode<synchronous>, transform_indices = @transform_0, window_bounds = array<i64: 256, 256>}, {pipeline_mode = #tpu.pipeline_mode<synchronous>, transform_indices = @transform_1, window_bounds = array<i64: 256, 128>}, {pipeline_mode = #tpu.pipeline_mode<synchronous>, transform_indices = @transform_2, window_bounds = array<i64: 128, 128>}, {pipeline_mode = #tpu.pipeline_mode<synchronous>, transform_indices = @transform_3, window_bounds = array<i64: 1, 128>}, {pipeline_mode = #tpu.pipeline_mode<synchronous>, transform_indices = @transform_4, window_bounds = array<i64: 128, 128>}, {pipeline_mode = #tpu.pipeline_mode<synchronous>, transform_indices = @transform_5, window_bounds = array<i64: 1, 128>}, {transform_indices = @transform_6, window_bounds = array<i64: 128, 128>}]} {
    %c0_i32 = arith.constant 0 : i32
    %0 = arith.cmpi eq, %arg0, %c0_i32 : i32
    %c0_i32_0 = arith.constant 0 : i32
    %1 = arith.cmpi eq, %arg1, %c0_i32_0 : i32
    %2 = arith.andi %0, %1 : i1
    %3 = arith.extui %2 : i1 to i32
    %c0_i32_1 = arith.constant 0 : i32
    %4 = arith.cmpi ne, %3, %c0_i32_1 : i32
    scf.if %4 {
      %c0_10 = arith.constant 0 : index
      %c0_11 = arith.constant 0 : index
      %22 = vector.load %arg3[%c0_10, %c0_11] : memref<256x128xbf16, #tpu.memory_space<vmem>>, vector<256x128xbf16>
      %c0_12 = arith.constant 0 : index
      %c0_13 = arith.constant 0 : index
      %23 = vector.load %arg4[%c0_12, %c0_13] : memref<128x128xbf16, #tpu.memory_space<vmem>>, vector<128x128xbf16>
      %cst_14 = arith.constant dense<0.000000e+00> : vector<256x128xf32>
      %24 = tpu.matmul %22, %23, %cst_14 {dimension_numbers = #tpu.dot_dimension_numbers<[1], [0], [0], [1], [0, 0, 1, 1], [], []>} : vector<256x128xbf16>, vector<128x128xbf16>, vector<256x128xf32> -> vector<256x128xf32>
      %25 = arith.truncf %24 : vector<256x128xf32> to vector<256x128xbf16>
      %c0_15 = arith.constant 0 : index
      %c0_16 = arith.constant 0 : index
      %26 = vector.load %arg9[%c0_15, %c0_16] : memref<256x128xbf16, #tpu.memory_space<vmem>>, vector<256x128xbf16>
      tpu.vector_store %arg9[%c0_15, %c0_16], %25 {strides = array<i32>} : memref<256x128xbf16, #tpu.memory_space<vmem>>, vector<256x128xbf16>,
    } else {
    }
    %c1_i32 = arith.constant 1 : i32
    %5 = arith.cmpi eq, %arg0, %c1_i32 : i32
    %c0_i32_2 = arith.constant 0 : i32
    %6 = arith.cmpi eq, %arg1, %c0_i32_2 : i32
    %7 = arith.andi %5, %6 : i1
    %8 = arith.extui %7 : i1 to i32
    %c0_i32_3 = arith.constant 0 : i32
    %9 = arith.cmpi ne, %8, %c0_i32_3 : i32
    scf.if %9 {
      %c0_10 = arith.constant 0 : index
      %c0_11 = arith.constant 0 : index
      %22 = vector.load %arg10[%c0_10, %c0_11] : memref<256x128xbf16, #tpu.memory_space<vmem>>, vector<256x128xbf16>
      %c0_12 = arith.constant 0 : index
      %c0_13 = arith.constant 0 : index
      %23 = vector.load %arg6[%c0_12, %c0_13] : memref<128x128xbf16, #tpu.memory_space<vmem>>, vector<128x128xbf16>
      %cst_14 = arith.constant dense<0.000000e+00> : vector<256x128xf32>
      %24 = tpu.matmul %22, %23, %cst_14 {dimension_numbers = #tpu.dot_dimension_numbers<[1], [0], [0], [1], [0, 0, 1, 1], [], []>} : vector<256x128xbf16>, vector<128x128xbf16>, vector<256x128xf32> -> vector<256x128xf32>
      %25 = arith.truncf %24 : vector<256x128xf32> to vector<256x128xbf16>
      %c0_15 = arith.constant 0 : index
      %c0_16 = arith.constant 0 : index
      %26 = vector.load %arg9[%c0_15, %c0_16] : memref<256x128xbf16, #tpu.memory_space<vmem>>, vector<256x128xbf16>
      tpu.vector_store %arg9[%c0_15, %c0_16], %25 {strides = array<i32>} : memref<256x128xbf16, #tpu.memory_space<vmem>>, vector<256x128xbf16>,
    } else {
    }
    %c128_i32 = arith.constant 128 : i32
    %10 = arith.muli %arg1, %c128_i32 : i32
    %11 = tpu.assume_multiple %10, 128 : i32
    %12 = arith.index_cast %11 : i32 to index
    %c0 = arith.constant 0 : index
    %13 = vector.load %arg2[%12, %c0] : memref<256x256xbf16, #tpu.memory_space<vmem>>, vector<128x256xbf16>
    %c0_4 = arith.constant 0 : index
    %c0_5 = arith.constant 0 : index
    %14 = vector.load %arg9[%c0_4, %c0_5] : memref<256x128xbf16, #tpu.memory_space<vmem>>, vector<256x128xbf16>
    %cst = arith.constant dense<0.000000e+00> : vector<128x128xf32>
    %15 = tpu.matmul %13, %14, %cst {dimension_numbers = #tpu.dot_dimension_numbers<[1], [0], [0], [1], [0, 0, 1, 1], [], []>} : vector<128x256xbf16>, vector<256x128xbf16>, vector<128x128xf32> -> vector<128x128xf32>
    %c0_i32_6 = arith.constant 0 : i32
    %16 = arith.cmpi eq, %arg0, %c0_i32_6 : i32
    %17 = arith.extui %16 : i1 to i32
    %c0_i32_7 = arith.constant 0 : i32
    %18 = arith.cmpi ne, %17, %c0_i32_7 : i32
    scf.if %18 {
      %c0_10 = arith.constant 0 : index
      %c0_11 = arith.constant 0 : index
      %22 = vector.load %arg5[%c0_10, %c0_11] : memref<1x128xf32, #tpu.memory_space<vmem>>, vector<1x128xf32>
      %23 = vector.broadcast %22 : vector<1x128xf32> to vector<128x128xf32>
      %24 = arith.addf %15, %23 : vector<128x128xf32>
      %cst_12 = arith.constant 0.000000e+00 : f32
      %25 = vector.broadcast %cst_12 : f32 to vector<128x128xf32>
      %26 = arith.maximumf %24, %25 : vector<128x128xf32>
      %27 = arith.truncf %26 : vector<128x128xf32> to vector<128x128xbf16>
      %28 = arith.index_cast %11 : i32 to index
      %c0_13 = arith.constant 0 : index
      %29 = vector.load %arg10[%28, %c0_13] : memref<256x128xbf16, #tpu.memory_space<vmem>>, vector<128x128xbf16>
      tpu.vector_store %arg10[%28, %c0_13], %27 {strides = array<i32>} : memref<256x128xbf16, #tpu.memory_space<vmem>>, vector<128x128xbf16>,
    } else {
    }
    %c1_i32_8 = arith.constant 1 : i32
    %19 = arith.cmpi eq, %arg0, %c1_i32_8 : i32
    %20 = arith.extui %19 : i1 to i32
    %c0_i32_9 = arith.constant 0 : i32
    %21 = arith.cmpi ne, %20, %c0_i32_9 : i32
    scf.if %21 {
      %c0_10 = arith.constant 0 : index
      %c0_11 = arith.constant 0 : index
      %22 = vector.load %arg7[%c0_10, %c0_11] : memref<1x128xf32, #tpu.memory_space<vmem>>, vector<1x128xf32>
      %23 = vector.broadcast %22 : vector<1x128xf32> to vector<128x128xf32>
      %24 = arith.addf %15, %23 : vector<128x128xf32>
      %c0_12 = arith.constant 0 : index
      %c0_13 = arith.constant 0 : index
      %25 = vector.load %arg8[%c0_12, %c0_13] : memref<128x128xf32, #tpu.memory_space<vmem>>, vector<128x128xf32>
      tpu.vector_store %arg8[%c0_12, %c0_13], %24 {strides = array<i32>} : memref<128x128xf32, #tpu.memory_space<vmem>>, vector<128x128xf32>,
    } else {
    }
    return
  }
  func.func @transform_0(%arg0: i32, %arg1: i32) -> (i32, i32) {
    %c0_i32 = arith.constant 0 : i32
    %c0_i32_0 = arith.constant 0 : i32
    %c0_i32_1 = arith.constant 0 : i32
    return %c0_i32, %c0_i32_0 : i32, i32
  }
  func.func @transform_1(%arg0: i32, %arg1: i32) -> (i32, i32) {
    %c0_i32 = arith.constant 0 : i32
    %c0_i32_0 = arith.constant 0 : i32
    %c0_i32_1 = arith.constant 0 : i32
    return %c0_i32, %c0_i32_0 : i32, i32
  }
  func.func @transform_2(%arg0: i32, %arg1: i32) -> (i32, i32) {
    %c0_i32 = arith.constant 0 : i32
    %c0_i32_0 = arith.constant 0 : i32
    %c0_i32_1 = arith.constant 0 : i32
    return %c0_i32, %c0_i32_0 : i32, i32
  }
  func.func @transform_3(%arg0: i32, %arg1: i32) -> (i32, i32) {
    %c0_i32 = arith.constant 0 : i32
    %c0_i32_0 = arith.constant 0 : i32
    %c0_i32_1 = arith.constant 0 : i32
    return %c0_i32, %c0_i32_0 : i32, i32
  }
  func.func @transform_4(%arg0: i32, %arg1: i32) -> (i32, i32) {
    %c0_i32 = arith.constant 0 : i32
    %c0_i32_0 = arith.constant 0 : i32
    %c0_i32_1 = arith.constant 0 : i32
    return %c0_i32, %c0_i32_0 : i32, i32
  }
  func.func @transform_5(%arg0: i32, %arg1: i32) -> (i32, i32) {
    %c0_i32 = arith.constant 0 : i32
    %c0_i32_0 = arith.constant 0 : i32
    %c0_i32_1 = arith.constant 0 : i32
    return %c0_i32, %c0_i32_0 : i32, i32
  }
  func.func @transform_6(%arg0: i32, %arg1: i32) -> (i32, i32) {
    %0 = arith.muli %arg1, %arg0 : i32
    %c0_i32 = arith.constant 0 : i32
    %c0_i32_0 = arith.constant 0 : i32
    return %0, %c0_i32 : i32, i32
  }
}

</mosaic_0001>

<llo_original>
// kernel: _lambda_.1
$region0: #{_lambda_.1}
  #allocation0 [shape = 'u32[]', space=smem, size = 0x4, offset = 0x4, fixed_abs, tag = 'smem constant byte address 0x4 - core index']
  #allocation1 [shape = 'u32[144,128]{1,0:T(1,128)}', space=vmem, size = 0x12000, scoped, tag = 'internal scratch']
  #allocation2 [shape = 'bf16[256,128]{1,0:T(16,128)(2,1)}', space=vmem, size = 0x10000, scoped, tag = 'scratch operand']
  #allocation3 [shape = 'bf16[256,128]{1,0:T(16,128)(2,1)}', space=vmem, size = 0x10000, scoped, tag = 'scratch operand']
  %s0 = inlined_call_operand.vmem [shape: bf16[256,256], index: 0, kind: input, shape index: {}]
  %s1 = inlined_call_operand.vmem [shape: bf16[256,128], index: 1, kind: input, shape index: {}]
  %s2 = inlined_call_operand.vmem [shape: bf16[128,128], index: 2, kind: input, shape index: {}]
  %s3 = inlined_call_operand.vmem [shape: f32[1,128], index: 3, kind: input, shape index: {}]
  %s4 = inlined_call_operand.vmem [shape: bf16[128,128], index: 4, kind: input, shape index: {}]
  %s5 = inlined_call_operand.vmem [shape: f32[1,128], index: 5, kind: input, shape index: {}]
  %s6 = inlined_call_operand.vmem [shape: f32[256,128], index: 6, kind: output, shape index: {}]
  %s7 = sld [smem:[#allocation0]]
  $region73: #{_lambda_.1} parent=0
    _
  %s9 = ssub.s32 1, %s7
  %s10 = scalar_select 0, %s9, %s7
  loop: start=0, step=1, limit=6
  $region2: #{_lambda_.1} parent=0 // loop_pre_header
    _
  $region3: #{_lambda_.1} parent=0 // loop_header
    %s12 = sphi 0, %s16
    %p13 = scmp.ge.s32.totalorder %s12, 6
    %s19 = sphi 0, %s31
    %s20 = sphi 0, %s27
    %s21 = sphi 0, %s19
    %s22 = sphi 0, %s20
    %s23 = sphi 0, %s21
    %s24 = sphi 0, %s22
    %s32 = sphi 0, %s32
    %s34 = sphi 0, %s32
    %s35 = sphi 0, %s34
    %s49 = sphi 0, %s35
    %s53 = sphi 0, %s53
    %s55 = sphi 0, %s53
    %s56 = sphi 0, %s55
    %s70 = sphi 0, %s56
    %s74 = sphi 0, %s74
    %s76 = sphi 0, %s74
    %s77 = sphi 0, %s76
    %s91 = sphi 0, %s77
    %s95 = sphi 0, %s95
    %s97 = sphi 0, %s95
    %s98 = sphi 0, %s97
    %s112 = sphi 0, %s98
    %s116 = sphi 0, %s116
    %s118 = sphi 0, %s116
    %s119 = sphi 0, %s118
    %s133 = sphi 0, %s119
    %s137 = sphi 0, %s137
    %s139 = sphi 0, %s137
    %s140 = sphi 0, %s139
    %s154 = sphi 0, %s140
    %s162 = sphi 0, %s164
    %s165 = sphi 0, %s162
    %s166 = sphi 0, %s165
    %s182 = sphi 0, %s166
  $region4: #{_lambda_.1} parent=0 // loop_header_branch
    %15 = sbr.rel (%p13) target = $region8
  $region5: #{_lambda_.1} parent=0 // loop_body
    %s17 = ssub.s32 %s12, 1
    %s18 = ssub.s32 %s12, 2
    %s25 = sadd.s32 1, %s20
    %p26 = scmp.ge.s32.totalorder %s25, 2
    %s27 = scalar_select %p26, 0, %s25
    %s28 = sadd.s32 1, %s19
    %s29 = scalar_select %p26, %s28, %s19
    %p30 = scmp.ge.s32.totalorder %s29, 2
    %s31 = scalar_select %p30, 0, %s29
    %s33 = sadd.s32 %s32, 1
    %p36 = scmp.eq.s32.totalorder %s12, 3
    %p37 = scmp.ne.s32.totalorder %s32, %s34
    %p38 = scmp.eq.s32.totalorder %s12, 0
    %p39 = por %p37, %p38
    %p40 = scmp.ne.s32.totalorder %s32, %s34
    %p41 = scmp.eq.s32.totalorder %s17, 3
    %p42 = por %p40, %p41
    %p43 = scmp.ne.s32.totalorder %s34, %s35
    %p44 = scmp.eq.s32.totalorder %s17, 0
    %p45 = por %p43, %p44
    %p46 = scmp.ne.s32.totalorder %s34, %s35
    %p47 = scmp.eq.s32.totalorder %s18, 3
    %p48 = por %p46, %p47
    %p50 = scmp.ne.s32.totalorder %s35, %s49
    %p51 = scmp.eq.s32.totalorder %s18, 0
    %p52 = por %p50, %p51
    %s54 = sadd.s32 %s53, 1
    %p57 = scmp.eq.s32.totalorder %s12, 3
    %p58 = scmp.ne.s32.totalorder %s53, %s55
    %p59 = scmp.eq.s32.totalorder %s12, 0
    %p60 = por %p58, %p59
    %p61 = scmp.ne.s32.totalorder %s53, %s55
    %p62 = scmp.eq.s32.totalorder %s17, 3
    %p63 = por %p61, %p62
    %p64 = scmp.ne.s32.totalorder %s55, %s56
    %p65 = scmp.eq.s32.totalorder %s17, 0
    %p66 = por %p64, %p65
    %p67 = scmp.ne.s32.totalorder %s55, %s56
    %p68 = scmp.eq.s32.totalorder %s18, 3
    %p69 = por %p67, %p68
    %p71 = scmp.ne.s32.totalorder %s56, %s70
    %p72 = scmp.eq.s32.totalorder %s18, 0
    %p73 = por %p71, %p72
    %s75 = sadd.s32 %s74, 1
    %p78 = scmp.eq.s32.totalorder %s12, 3
    %p79 = scmp.ne.s32.totalorder %s74, %s76
    %p80 = scmp.eq.s32.totalorder %s12, 0
    %p81 = por %p79, %p80
    %p82 = scmp.ne.s32.totalorder %s74, %s76
    %p83 = scmp.eq.s32.totalorder %s17, 3
    %p84 = por %p82, %p83
    %p85 = scmp.ne.s32.totalorder %s76, %s77
    %p86 = scmp.eq.s32.totalorder %s17, 0
    %p87 = por %p85, %p86
    %p88 = scmp.ne.s32.totalorder %s76, %s77
    %p89 = scmp.eq.s32.totalorder %s18, 3
    %p90 = por %p88, %p89
    %p92 = scmp.ne.s32.totalorder %s77, %s91
    %p93 = scmp.eq.s32.totalorder %s18, 0
    %p94 = por %p92, %p93
    %s96 = sadd.s32 %s95, 1
    %p99 = scmp.eq.s32.totalorder %s12, 3
    %p100 = scmp.ne.s32.totalorder %s95, %s97
    %p101 = scmp.eq.s32.totalorder %s12, 0
    %p102 = por %p100, %p101
    %p103 = scmp.ne.s32.totalorder %s95, %s97
    %p104 = scmp.eq.s32.totalorder %s17, 3
    %p105 = por %p103, %p104
    %p106 = scmp.ne.s32.totalorder %s97, %s98
    %p107 = scmp.eq.s32.totalorder %s17, 0
    %p108 = por %p106, %p107
    %p109 = scmp.ne.s32.totalorder %s97, %s98
    %p110 = scmp.eq.s32.totalorder %s18, 3
    %p111 = por %p109, %p110
    %p113 = scmp.ne.s32.totalorder %s98, %s112
    %p114 = scmp.eq.s32.totalorder %s18, 0
    %p115 = por %p113, %p114
    %s117 = sadd.s32 %s116, 1
    %p120 = scmp.eq.s32.totalorder %s12, 3
    %p121 = scmp.ne.s32.totalorder %s116, %s118
    %p122 = scmp.eq.s32.totalorder %s12, 0
    %p123 = por %p121, %p122
    %p124 = scmp.ne.s32.totalorder %s116, %s118
    %p125 = scmp.eq.s32.totalorder %s17, 3
    %p126 = por %p124, %p125
    %p127 = scmp.ne.s32.totalorder %s118, %s119
    %p128 = scmp.eq.s32.totalorder %s17, 0
    %p129 = por %p127, %p128
    %p130 = scmp.ne.s32.totalorder %s118, %s119
    %p131 = scmp.eq.s32.totalorder %s18, 3
    %p132 = por %p130, %p131
    %p134 = scmp.ne.s32.totalorder %s119, %s133
    %p135 = scmp.eq.s32.totalorder %s18, 0
    %p136 = por %p134, %p135
    %s138 = sadd.s32 %s137, 1
    %p141 = scmp.eq.s32.totalorder %s12, 3
    %p142 = scmp.ne.s32.totalorder %s137, %s139
    %p143 = scmp.eq.s32.totalorder %s12, 0
    %p144 = por %p142, %p143
    %p145 = scmp.ne.s32.totalorder %s137, %s139
    %p146 = scmp.eq.s32.totalorder %s17, 3
    %p147 = por %p145, %p146
    %p148 = scmp.ne.s32.totalorder %s139, %s140
    %p149 = scmp.eq.s32.totalorder %s17, 0
    %p150 = por %p148, %p149
    %p151 = scmp.ne.s32.totalorder %s139, %s140
    %p152 = scmp.eq.s32.totalorder %s18, 3
    %p153 = por %p151, %p152
    %p155 = scmp.ne.s32.totalorder %s140, %s154
    %p156 = scmp.eq.s32.totalorder %s18, 0
    %p157 = por %p155, %p156
    %s158 = smul.u32 %s20, %s19
    %s159 = smul.u32 %s27, %s31
    %s160 = ssub.s32 %s158, %s159
    %p161 = scmp.eq.s32.totalorder %s160, 0
    %s163 = sadd.s32 %s162, 1
    %s164 = scalar_select %p161, %s162, %s163
    %p167 = pneg %p161
    %p168 = scmp.eq.s32.totalorder %s12, 3
    %p169 = por %p167, %p168
    %p170 = scmp.ne.s32.totalorder %s162, %s165
    %p171 = scmp.eq.s32.totalorder %s12, 0
    %p172 = por %p170, %p171
    %p173 = scmp.ne.s32.totalorder %s162, %s165
    %p174 = scmp.eq.s32.totalorder %s17, 3
    %p175 = por %p173, %p174
    %p176 = scmp.ne.s32.totalorder %s165, %s166
    %p177 = scmp.eq.s32.totalorder %s17, 0
    %p178 = por %p176, %p177
    %p179 = scmp.ne.s32.totalorder %s165, %s166
    %p180 = scmp.eq.s32.totalorder %s18, 3
    %p181 = por %p179, %p180
    %p183 = scmp.ne.s32.totalorder %s166, %s182
    %p184 = scmp.eq.s32.totalorder %s18, 0
    %p185 = por %p183, %p184
    %p186 = scmp.le.s32.totalorder 1, %s12
    %p187 = scmp.lt.s32.totalorder %s12, 5
    %p188 = pnand %p186, %p187
    %p189 = pneg %p188
    // Predicated region
    $region9: #{_lambda_.1} parent=5 // pred_check
      _
    $region10: #{_lambda_.1} parent=5 // pred_check_branch
      %191 = sbr.rel (%p188) target = $region12
    $region11: #{_lambda_.1} parent=5 // pred_region
      %s192 = ssub.s32 %s12, 1
      // Predicated region
      $region13: #{_lambda_.1} parent=11 // pred_check
        %p193 = pneg %p45
      $region14: #{_lambda_.1} parent=11 // pred_check_branch
        %195 = sbr.rel (%p193) target = $region16
      $region15: #{_lambda_.1} parent=11 // pred_region
        _
      $region16: #{_lambda_.1} parent=11 // pred_fallthru
        _
      // Predicated region
      $region17: #{_lambda_.1} parent=11 // pred_check
        %p196 = pneg %p66
      $region18: #{_lambda_.1} parent=11 // pred_check_branch
        %198 = sbr.rel (%p196) target = $region20
      $region19: #{_lambda_.1} parent=11 // pred_region
        _
      $region20: #{_lambda_.1} parent=11 // pred_fallthru
        _
      // Predicated region
      $region21: #{_lambda_.1} parent=11 // pred_check
        %p199 = pneg %p87
      $region22: #{_lambda_.1} parent=11 // pred_check_branch
        %201 = sbr.rel (%p199) target = $region24
      $region23: #{_lambda_.1} parent=11 // pred_region
        _
      $region24: #{_lambda_.1} parent=11 // pred_fallthru
        _
      // Predicated region
      $region25: #{_lambda_.1} parent=11 // pred_check
        %p202 = pneg %p108
      $region26: #{_lambda_.1} parent=11 // pred_check_branch
        %204 = sbr.rel (%p202) target = $region28
      $region27: #{_lambda_.1} parent=11 // pred_region
        _
      $region28: #{_lambda_.1} parent=11 // pred_fallthru
        _
      // Predicated region
      $region29: #{_lambda_.1} parent=11 // pred_check
        %p205 = pneg %p129
      $region30: #{_lambda_.1} parent=11 // pred_check_branch
        %207 = sbr.rel (%p205) target = $region32
      $region31: #{_lambda_.1} parent=11 // pred_region
        _
      $region32: #{_lambda_.1} parent=11 // pred_fallthru
        _
      // Predicated region
      $region33: #{_lambda_.1} parent=11 // pred_check
        %p208 = pneg %p150
      $region34: #{_lambda_.1} parent=11 // pred_check_branch
        %210 = sbr.rel (%p208) target = $region36
      $region35: #{_lambda_.1} parent=11 // pred_region
        _
      $region36: #{_lambda_.1} parent=11 // pred_fallthru
        _
    $region12: #{_lambda_.1} parent=5 // pred_fallthru
      _
    %p211 = scmp.lt.s32.totalorder %s12, 4
    // Predicated region
    $region37: #{_lambda_.1} parent=5 // pred_check
      %p212 = pneg %p211
    $region38: #{_lambda_.1} parent=5 // pred_check_branch
      %214 = sbr.rel (%p212) target = $region40
    $region39: #{_lambda_.1} parent=5 // pred_region
      _
    $region40: #{_lambda_.1} parent=5 // pred_fallthru
      _
    %p215 = scmp.le.s32.totalorder 1, %s12
    %p216 = scmp.lt.s32.totalorder %s12, 5
    %p217 = pnand %p215, %p216
    %p218 = pneg %p217
    // Predicated region
    $region41: #{_lambda_.1} parent=5 // pred_check
      _
    $region42: #{_lambda_.1} parent=5 // pred_check_branch
      %220 = sbr.rel (%p217) target = $region44
    $region43: #{_lambda_.1} parent=5 // pred_region
      %s221 = ssub.s32 %s12, 1
      %p222 = pneg %p45
      %p223 = pneg %p42
      %p224 = pneg %p66
      %p225 = pneg %p63
      %p226 = pneg %p87
      %p227 = pneg %p84
      %p228 = pneg %p108
      %p229 = pneg %p105
      %p230 = pneg %p129
      %p231 = pneg %p126
      %p232 = pneg %p150
      %p233 = pneg %p147
      %p234 = pneg %p178
      %p235 = pneg %p175
      %s236 = smul.u32 %s22, %s21
      %s237 = smul.u32 16, %s236
      %p238 = scmp.lt.s32.totalorder %s237, 31
      %s239 = scalar_select %p238, %s237, 31
      %s240 = smul.addr %s239, 8
      %s241 = scalar_lea.vmem %s6, %s240
      %s242 = smul.u32 %s22, %s21
      %s243 = smul.u32 16, %s242
      %p244 = scmp.lt.s32.totalorder %s243, 31
      %s245 = scalar_select %p244, %s243, 31
      %s246 = smul.addr %s245, 8
      %s247 = scalar_lea.vmem %s6, %s246
      %s248 = smul.u32 %s22, %s21
      %s249 = smul.u32 16, %s248
      %p251 = scmp.eq.s32.totalorder %s21, 0
      %p252 = scmp.eq.s32.totalorder %s22, 0
      %p253 = pnand %p251, %p252
      %p254 = pneg %p253
      // Predicated region
      $region45: #{_lambda_.1} parent=43 // pred_check
        _
      $region46: #{_lambda_.1} parent=43 // pred_check_branch
        %256 = sbr.rel (%p253) target = $region48
      $region47: #{_lambda_.1} parent=43 // pred_region
        %v257 = vld [vmem:[%s1] sm:$0xf]
        %v258 = vld [vmem:[%s1 + $0x4] sm:$0xf]
        %v259 = vld [vmem:[%s1 + $0x8] sm:$0xf]
        %v260 = vld [vmem:[%s1 + $0xc] sm:$0xf]
        %v261 = vld [vmem:[%s1 + $0x10] sm:$0xf]
        %v262 = vld [vmem:[%s1 + $0x14] sm:$0xf]
        %v263 = vld [vmem:[%s1 + $0x18] sm:$0xf]
        %v264 = vld [vmem:[%s1 + $0x1c] sm:$0xf]
        %v265 = vld [vmem:[%s1 + $0x20] sm:$0xf]
        %v266 = vld [vmem:[%s1 + $0x24] sm:$0xf]
        %v267 = vld [vmem:[%s1 + $0x28] sm:$0xf]
        %v268 = vld [vmem:[%s1 + $0x2c] sm:$0xf]
        %v269 = vld [vmem:[%s1 + $0x30] sm:$0xf]
        %v270 = vld [vmem:[%s1 + $0x34] sm:$0xf]
        %v271 = vld [vmem:[%s1 + $0x38] sm:$0xf]
        %v272 = vld [vmem:[%s1 + $0x3c] sm:$0xf]
        %v273 = vld [vmem:[%s1 + $0x40] sm:$0xf]
        %v274 = vld [vmem:[%s1 + $0x44] sm:$0xf]
        %v275 = vld [vmem:[%s1 + $0x48] sm:$0xf]
        %v276 = vld [vmem:[%s1 + $0x4c] sm:$0xf]
        %v277 = vld [vmem:[%s1 + $0x50] sm:$0xf]
        %v278 = vld [vmem:[%s1 + $0x54] sm:$0xf]
        %v279 = vld [vmem:[%s1 + $0x58] sm:$0xf]
        %v280 = vld [vmem:[%s1 + $0x5c] sm:$0xf]
        %v281 = vld [vmem:[%s1 + $0x60] sm:$0xf]
        %v282 = vld [vmem:[%s1 + $0x64] sm:$0xf]
        %v283 = vld [vmem:[%s1 + $0x68] sm:$0xf]
        %v284 = vld [vmem:[%s1 + $0x6c] sm:$0xf]
        %v285 = vld [vmem:[%s1 + $0x70] sm:$0xf]
        %v286 = vld [vmem:[%s1 + $0x74] sm:$0xf]
        %v287 = vld [vmem:[%s1 + $0x78] sm:$0xf]
        %v288 = vld [vmem:[%s1 + $0x7c] sm:$0xf]
        %v289 = vld [vmem:[%s2] sm:$0xf]
        %v290 = vld [vmem:[%s2 + $0x4] sm:$0xf]
        %v291 = vld [vmem:[%s2 + $0x8] sm:$0xf]
        %v292 = vld [vmem:[%s2 + $0xc] sm:$0xf]
        %v293 = vld [vmem:[%s2 + $0x10] sm:$0xf]
        %v294 = vld [vmem:[%s2 + $0x14] sm:$0xf]
        %v295 = vld [vmem:[%s2 + $0x18] sm:$0xf]
        %v296 = vld [vmem:[%s2 + $0x1c] sm:$0xf]
        %v297 = vld [vmem:[%s2 + $0x20] sm:$0xf]
        %v298 = vld [vmem:[%s2 + $0x24] sm:$0xf]
        %v299 = vld [vmem:[%s2 + $0x28] sm:$0xf]
        %v300 = vld [vmem:[%s2 + $0x2c] sm:$0xf]
        %v301 = vld [vmem:[%s2 + $0x30] sm:$0xf]
        %v302 = vld [vmem:[%s2 + $0x34] sm:$0xf]
        %v303 = vld [vmem:[%s2 + $0x38] sm:$0xf]
        %v304 = vld [vmem:[%s2 + $0x3c] sm:$0xf]
        %v337 = vunpack.c.l.b16 %v257
        %v338 = vunpack.c.l.b16 %v258
        %v339 = vunpack.c.l.b16 %v259
        %v340 = vunpack.c.l.b16 %v260
        %v341 = vunpack.c.l.b16 %v261
        %v342 = vunpack.c.l.b16 %v262
        %v343 = vunpack.c.l.b16 %v263
        %v344 = vunpack.c.l.b16 %v264
        %v345 = vunpack.c.l.b16 %v265
        %v346 = vunpack.c.l.b16 %v266
        %v347 = vunpack.c.l.b16 %v267
        %v348 = vunpack.c.l.b16 %v268
        %v349 = vunpack.c.l.b16 %v269
        %v350 = vunpack.c.l.b16 %v270
        %v351 = vunpack.c.l.b16 %v271
        %v352 = vunpack.c.l.b16 %v272
        %v353 = vunpack.c.l.b16 %v273
        %v354 = vunpack.c.l.b16 %v274
        %v355 = vunpack.c.l.b16 %v275
        %v356 = vunpack.c.l.b16 %v276
        %v357 = vunpack.c.l.b16 %v277
        %v358 = vunpack.c.l.b16 %v278
        %v359 = vunpack.c.l.b16 %v279
        %v360 = vunpack.c.l.b16 %v280
        %v361 = vunpack.c.l.b16 %v281
        %v362 = vunpack.c.l.b16 %v282
        %v363 = vunpack.c.l.b16 %v283
        %v364 = vunpack.c.l.b16 %v284
        %v365 = vunpack.c.l.b16 %v285
        %v366 = vunpack.c.l.b16 %v286
        %v367 = vunpack.c.l.b16 %v287
        %v368 = vunpack.c.l.b16 %v288
        %v369 = vpack.c.b16 %v338, %v337
        %v370 = vpack.c.b16 %v340, %v339
        %v371 = vpack.c.b16 %v342, %v341
        %v372 = vpack.c.b16 %v344, %v343
        %v373 = vpack.c.b16 %v346, %v345
        %v374 = vpack.c.b16 %v348, %v347
        %v375 = vpack.c.b16 %v350, %v349
        %v376 = vpack.c.b16 %v352, %v351
        %v377 = vpack.c.b16 %v354, %v353
        %v378 = vpack.c.b16 %v356, %v355
        %v379 = vpack.c.b16 %v358, %v357
        %v380 = vpack.c.b16 %v360, %v359
        %v381 = vpack.c.b16 %v362, %v361
        %v382 = vpack.c.b16 %v364, %v363
        %v383 = vpack.c.b16 %v366, %v365
        %v384 = vpack.c.b16 %v368, %v367
        %v417 = vunpack.c.l.b16 %v289
        %v418 = vunpack.c.l.b16 %v290
        %v419 = vunpack.c.l.b16 %v291
        %v420 = vunpack.c.l.b16 %v292
        %v421 = vunpack.c.l.b16 %v293
        %v422 = vunpack.c.l.b16 %v294
        %v423 = vunpack.c.l.b16 %v295
        %v424 = vunpack.c.l.b16 %v296
        %v425 = vunpack.c.l.b16 %v297
        %v426 = vunpack.c.l.b16 %v298
        %v427 = vunpack.c.l.b16 %v299
        %v428 = vunpack.c.l.b16 %v300
        %v429 = vunpack.c.l.b16 %v301
        %v430 = vunpack.c.l.b16 %v302
        %v431 = vunpack.c.l.b16 %v303
        %v432 = vunpack.c.l.b16 %v304
        %v433 = vpack.c.b16 %v418, %v417
        %v434 = vpack.c.b16 %v420, %v419
        %v435 = vpack.c.b16 %v422, %v421
        %v436 = vpack.c.b16 %v424, %v423
        %v437 = vpack.c.b16 %v426, %v425
        %v438 = vpack.c.b16 %v428, %v427
        %v439 = vpack.c.b16 %v430, %v429
        %v440 = vpack.c.b16 %v432, %v431
        %449 = vmatprep.subr.bf16.mxu0 0
        %450 = vmatpush1.bf16.msra.mxu0 %v433
        %451 = vmatprep.subr.bf16.mxu0 0
        %452 = vmatpush1.bf16.msra.mxu0 %v434
        %453 = vmatprep.subr.bf16.mxu0 0
        %454 = vmatpush1.bf16.msra.mxu0 %v435
        %455 = vmatprep.subr.bf16.mxu0 0
        %456 = vmatpush1.bf16.msra.mxu0 %v436
        %457 = vmatprep.subr.bf16.mxu0 0
        %458 = vmatpush1.bf16.msra.mxu0 %v437
        %459 = vmatprep.subr.bf16.mxu0 0
        %460 = vmatpush1.bf16.msra.mxu0 %v438
        %461 = vmatprep.subr.bf16.mxu0 0
        %462 = vmatpush1.bf16.msra.mxu0 %v439
        %463 = vmatprep.subr.bf16.mxu0 0
        %464 = vmatpush1.bf16.msra.mxu0 %v440
        %465 = vmatprep.subr.bf16.mxu0 0
        %466 = vmatpush1.bf16.msra.mxu0 0
        %467 = vmatprep.subr.bf16.mxu0 0
        %468 = vmatpush1.bf16.msra.mxu0 0
        %469 = vmatprep.subr.bf16.mxu0 0
        %470 = vmatpush1.bf16.msra.mxu0 0
        %471 = vmatprep.subr.bf16.mxu0 0
        %472 = vmatpush1.bf16.msra.mxu0 0
        %473 = vmatprep.subr.bf16.mxu0 0
        %474 = vmatpush1.bf16.msra.mxu0 0
        %475 = vmatprep.subr.bf16.mxu0 0
        %476 = vmatpush1.bf16.msra.mxu0 0
        %477 = vmatprep.subr.bf16.mxu0 0
        %478 = vmatpush1.bf16.msra.mxu0 0
        %479 = vmatprep.subr.bf16.mxu0 0
        %480 = vmatpush1.bf16.msra.mxu0 0
        %481 = vmatprep.mubr.bf16.mxu0 0
        %482 = vmatmul.mubr.bf16.gmra.mrb[0].mxu0 %v369
        %v483 = vpop.f32.mrb[0].mxu0
        %v484 = vadd.f32 0.0, %v483
        %v485 = vpop.f32.mrb[0].mxu0
        %v486 = vpop.f32.mrb[0].mxu0
        %v487 = vadd.f32 0.0, %v486
        %v488 = vpop.f32.mrb[0].mxu0
        %489 = vmatprep.mubr.bf16.mxu0 0
        %490 = vmatmul.mubr.bf16.gmra.mrb[0].mxu0 %v370
        %v491 = vpop.f32.mrb[0].mxu0
        %v492 = vadd.f32 0.0, %v491
        %v493 = vpop.f32.mrb[0].mxu0
        %v494 = vpop.f32.mrb[0].mxu0
        %v495 = vadd.f32 0.0, %v494
        %v496 = vpop.f32.mrb[0].mxu0
        %497 = vmatprep.mubr.bf16.mxu0 0
        %498 = vmatmul.mubr.bf16.gmra.mrb[0].mxu0 %v371
        %v499 = vpop.f32.mrb[0].mxu0
        %v500 = vadd.f32 0.0, %v499
        %v501 = vpop.f32.mrb[0].mxu0
        %v502 = vpop.f32.mrb[0].mxu0
        %v503 = vadd.f32 0.0, %v502
        %v504 = vpop.f32.mrb[0].mxu0
        %505 = vmatprep.mubr.bf16.mxu0 0
        %506 = vmatmul.mubr.bf16.gmra.mrb[0].mxu0 %v372
        %v507 = vpop.f32.mrb[0].mxu0
        %v508 = vadd.f32 0.0, %v507
        %v509 = vpop.f32.mrb[0].mxu0
        %v510 = vpop.f32.mrb[0].mxu0
        %v511 = vadd.f32 0.0, %v510
        %v512 = vpop.f32.mrb[0].mxu0
        %513 = vmatprep.mubr.bf16.mxu0 0
        %514 = vmatmul.mubr.bf16.gmra.mrb[0].mxu0 %v373
        %v515 = vpop.f32.mrb[0].mxu0
        %v516 = vadd.f32 0.0, %v515
        %v517 = vpop.f32.mrb[0].mxu0
        %v518 = vpop.f32.mrb[0].mxu0
        %v519 = vadd.f32 0.0, %v518
        %v520 = vpop.f32.mrb[0].mxu0
        %521 = vmatprep.mubr.bf16.mxu0 0
        %522 = vmatmul.mubr.bf16.gmra.mrb[0].mxu0 %v374
        %v523 = vpop.f32.mrb[0].mxu0
        %v524 = vadd.f32 0.0, %v523
        %v525 = vpop.f32.mrb[0].mxu0
        %v526 = vpop.f32.mrb[0].mxu0
        %v527 = vadd.f32 0.0, %v526
        %v528 = vpop.f32.mrb[0].mxu0
        %529 = vmatprep.mubr.bf16.mxu0 0
        %530 = vmatmul.mubr.bf16.gmra.mrb[0].mxu0 %v375
        %v531 = vpop.f32.mrb[0].mxu0
        %v532 = vadd.f32 0.0, %v531
        %v533 = vpop.f32.mrb[0].mxu0
        %v534 = vpop.f32.mrb[0].mxu0
        %v535 = vadd.f32 0.0, %v534
        %v536 = vpop.f32.mrb[0].mxu0
        %537 = vmatprep.mubr.bf16.mxu0 0
        %538 = vmatmul.mubr.bf16.gmra.mrb[0].mxu0 %v376
        %v539 = vpop.f32.mrb[0].mxu0
        %v540 = vadd.f32 0.0, %v539
        %v541 = vpop.f32.mrb[0].mxu0
        %v542 = vpop.f32.mrb[0].mxu0
        %v543 = vadd.f32 0.0, %v542
        %v544 = vpop.f32.mrb[0].mxu0
        %545 = vmatprep.mubr.bf16.mxu0 0
        %546 = vmatmul.mubr.bf16.gmra.mrb[0].mxu0 %v377
        %v547 = vpop.f32.mrb[0].mxu0
        %v548 = vadd.f32 0.0, %v547
        %v549 = vpop.f32.mrb[0].mxu0
        %v550 = vpop.f32.mrb[0].mxu0
        %v551 = vadd.f32 0.0, %v550
        %v552 = vpop.f32.mrb[0].mxu0
        %553 = vmatprep.mubr.bf16.mxu0 0
        %554 = vmatmul.mubr.bf16.gmra.mrb[0].mxu0 %v378
        %v555 = vpop.f32.mrb[0].mxu0
        %v556 = vadd.f32 0.0, %v555
        %v557 = vpop.f32.mrb[0].mxu0
        %v558 = vpop.f32.mrb[0].mxu0
        %v559 = vadd.f32 0.0, %v558
        %v560 = vpop.f32.mrb[0].mxu0
        %561 = vmatprep.mubr.bf16.mxu0 0
        %562 = vmatmul.mubr.bf16.gmra.mrb[0].mxu0 %v379
        %v563 = vpop.f32.mrb[0].mxu0
        %v564 = vadd.f32 0.0, %v563
        %v565 = vpop.f32.mrb[0].mxu0
        %v566 = vpop.f32.mrb[0].mxu0
        %v567 = vadd.f32 0.0, %v566
        %v568 = vpop.f32.mrb[0].mxu0
        %569 = vmatprep.mubr.bf16.mxu0 0
        %570 = vmatmul.mubr.bf16.gmra.mrb[0].mxu0 %v380
        %v571 = vpop.f32.mrb[0].mxu0
        %v572 = vadd.f32 0.0, %v571
        %v573 = vpop.f32.mrb[0].mxu0
        %v574 = vpop.f32.mrb[0].mxu0
        %v575 = vadd.f32 0.0, %v574
        %v576 = vpop.f32.mrb[0].mxu0
        %577 = vmatprep.mubr.bf16.mxu0 0
        %578 = vmatmul.mubr.bf16.gmra.mrb[0].mxu0 %v381
        %v579 = vpop.f32.mrb[0].mxu0
        %v580 = vadd.f32 0.0, %v579
        %v581 = vpop.f32.mrb[0].mxu0
        %v582 = vpop.f32.mrb[0].mxu0
        %v583 = vadd.f32 0.0, %v582
        %v584 = vpop.f32.mrb[0].mxu0
        %585 = vmatprep.mubr.bf16.mxu0 0
        %586 = vmatmul.mubr.bf16.gmra.mrb[0].mxu0 %v382
        %v587 = vpop.f32.mrb[0].mxu0
        %v588 = vadd.f32 0.0, %v587
        %v589 = vpop.f32.mrb[0].mxu0
        %v590 = vpop.f32.mrb[0].mxu0
        %v591 = vadd.f32 0.0, %v590
        %v592 = vpop.f32.mrb[0].mxu0
        %593 = vmatprep.mubr.bf16.mxu0 0
        %594 = vmatmul.mubr.bf16.gmra.mrb[0].mxu0 %v383
        %v595 = vpop.f32.mrb[0].mxu0
        %v596 = vadd.f32 0.0, %v595
        %v597 = vpop.f32.mrb[0].mxu0
        %v598 = vpop.f32.mrb[0].mxu0
        %v599 = vadd.f32 0.0, %v598
        %v600 = vpop.f32.mrb[0].mxu0
        %601 = vmatprep.mubr.bf16.mxu0 0
        %602 = vmatmul.mubr.bf16.gmra.mrb[0].mxu0 %v384
        %v603 = vpop.f32.mrb[0].mxu0
        %v604 = vadd.f32 0.0, %v603
        %v605 = vpop.f32.mrb[0].mxu0
        %v606 = vpop.f32.mrb[0].mxu0
        %v607 = vadd.f32 0.0, %v606
        %v608 = vpop.f32.mrb[0].mxu0
        %609 = vdwg.mxu0
        %v610 = vpack.c.bf16 %v487, %v484
        %v611 = vpack.c.bf16 %v495, %v492
        %v612 = vpack.c.bf16 %v503, %v500
        %v613 = vpack.c.bf16 %v511, %v508
        %v614 = vpack.c.bf16 %v519, %v516
        %v615 = vpack.c.bf16 %v527, %v524
        %v616 = vpack.c.bf16 %v535, %v532
        %v617 = vpack.c.bf16 %v543, %v540
        %v618 = vpack.c.bf16 %v551, %v548
        %v619 = vpack.c.bf16 %v559, %v556
        %v620 = vpack.c.bf16 %v567, %v564
        %v621 = vpack.c.bf16 %v575, %v572
        %v622 = vpack.c.bf16 %v583, %v580
        %v623 = vpack.c.bf16 %v591, %v588
        %v624 = vpack.c.bf16 %v599, %v596
        %v625 = vpack.c.bf16 %v607, %v604
        %626 = vst [vmem:[#allocation2] sm:$0xff] %v610
        %627 = vst [vmem:[#allocation2 + $0x8] sm:$0xff] %v611
        %628 = vst [vmem:[#allocation2 + $0x10] sm:$0xff] %v612
        %629 = vst [vmem:[#allocation2 + $0x18] sm:$0xff] %v613
        %630 = vst [vmem:[#allocation2 + $0x20] sm:$0xff] %v614
        %631 = vst [vmem:[#allocation2 + $0x28] sm:$0xff] %v615
        %632 = vst [vmem:[#allocation2 + $0x30] sm:$0xff] %v616
        %633 = vst [vmem:[#allocation2 + $0x38] sm:$0xff] %v617
        %634 = vst [vmem:[#allocation2 + $0x40] sm:$0xff] %v618
        %635 = vst [vmem:[#allocation2 + $0x48] sm:$0xff] %v619
        %636 = vst [vmem:[#allocation2 + $0x50] sm:$0xff] %v620
        %637 = vst [vmem:[#allocation2 + $0x58] sm:$0xff] %v621
        %638 = vst [vmem:[#allocation2 + $0x60] sm:$0xff] %v622
        %639 = vst [vmem:[#allocation2 + $0x68] sm:$0xff] %v623
        %640 = vst [vmem:[#allocation2 + $0x70] sm:$0xff] %v624
        %641 = vst [vmem:[#allocation2 + $0x78] sm:$0xff] %v625
      $region48: #{_lambda_.1} parent=43 // pred_fallthru
        _
      %p642 = scmp.eq.s32.totalorder %s21, 1
      %p643 = pnand %p642, %p252
      %p644 = pneg %p643
      // Predicated region
      $region49: #{_lambda_.1} parent=43 // pred_check
        _
      $region50: #{_lambda_.1} parent=43 // pred_check_branch
        %646 = sbr.rel (%p643) target = $region52
      $region51: #{_lambda_.1} parent=43 // pred_region
        %v647 = vld [vmem:[#allocation3] sm:$0xff]
        %v648 = vld [vmem:[#allocation3 + $0x8] sm:$0xff]
        %v649 = vld [vmem:[#allocation3 + $0x10] sm:$0xff]
        %v650 = vld [vmem:[#allocation3 + $0x18] sm:$0xff]
        %v651 = vld [vmem:[#allocation3 + $0x20] sm:$0xff]
        %v652 = vld [vmem:[#allocation3 + $0x28] sm:$0xff]
        %v653 = vld [vmem:[#allocation3 + $0x30] sm:$0xff]
        %v654 = vld [vmem:[#allocation3 + $0x38] sm:$0xff]
        %v655 = vld [vmem:[#allocation3 + $0x40] sm:$0xff]
        %v656 = vld [vmem:[#allocation3 + $0x48] sm:$0xff]
        %v657 = vld [vmem:[#allocation3 + $0x50] sm:$0xff]
        %v658 = vld [vmem:[#allocation3 + $0x58] sm:$0xff]
        %v659 = vld [vmem:[#allocation3 + $0x60] sm:$0xff]
        %v660 = vld [vmem:[#allocation3 + $0x68] sm:$0xff]
        %v661 = vld [vmem:[#allocation3 + $0x70] sm:$0xff]
        %v662 = vld [vmem:[#allocation3 + $0x78] sm:$0xff]
        %v663 = vld [vmem:[%s4] sm:$0xf]
        %v664 = vld [vmem:[%s4 + $0x4] sm:$0xf]
        %v665 = vld [vmem:[%s4 + $0x8] sm:$0xf]
        %v666 = vld [vmem:[%s4 + $0xc] sm:$0xf]
        %v667 = vld [vmem:[%s4 + $0x10] sm:$0xf]
        %v668 = vld [vmem:[%s4 + $0x14] sm:$0xf]
        %v669 = vld [vmem:[%s4 + $0x18] sm:$0xf]
        %v670 = vld [vmem:[%s4 + $0x1c] sm:$0xf]
        %v671 = vld [vmem:[%s4 + $0x20] sm:$0xf]
        %v672 = vld [vmem:[%s4 + $0x24] sm:$0xf]
        %v673 = vld [vmem:[%s4 + $0x28] sm:$0xf]
        %v674 = vld [vmem:[%s4 + $0x2c] sm:$0xf]
        %v675 = vld [vmem:[%s4 + $0x30] sm:$0xf]
        %v676 = vld [vmem:[%s4 + $0x34] sm:$0xf]
        %v677 = vld [vmem:[%s4 + $0x38] sm:$0xf]
        %v678 = vld [vmem:[%s4 + $0x3c] sm:$0xf]
        %v695 = vunpack.c.l.b16 %v663
        %v696 = vunpack.c.l.b16 %v664
        %v697 = vunpack.c.l.b16 %v665
        %v698 = vunpack.c.l.b16 %v666
        %v699 = vunpack.c.l.b16 %v667
        %v700 = vunpack.c.l.b16 %v668
        %v701 = vunpack.c.l.b16 %v669
        %v702 = vunpack.c.l.b16 %v670
        %v703 = vunpack.c.l.b16 %v671
        %v704 = vunpack.c.l.b16 %v672
        %v705 = vunpack.c.l.b16 %v673
        %v706 = vunpack.c.l.b16 %v674
        %v707 = vunpack.c.l.b16 %v675
        %v708 = vunpack.c.l.b16 %v676
        %v709 = vunpack.c.l.b16 %v677
        %v710 = vunpack.c.l.b16 %v678
        %v711 = vpack.c.b16 %v696, %v695
        %v712 = vpack.c.b16 %v698, %v697
        %v713 = vpack.c.b16 %v700, %v699
        %v714 = vpack.c.b16 %v702, %v701
        %v715 = vpack.c.b16 %v704, %v703
        %v716 = vpack.c.b16 %v706, %v705
        %v717 = vpack.c.b16 %v708, %v707
        %v718 = vpack.c.b16 %v710, %v709
        %727 = vmatprep.subr.bf16.mxu0 0
        %728 = vmatpush1.bf16.msra.mxu0 %v711
        %729 = vmatprep.subr.bf16.mxu0 0
        %730 = vmatpush1.bf16.msra.mxu0 %v712
        %731 = vmatprep.subr.bf16.mxu0 0
        %732 = vmatpush1.bf16.msra.mxu0 %v713
        %733 = vmatprep.subr.bf16.mxu0 0
        %734 = vmatpush1.bf16.msra.mxu0 %v714
        %735 = vmatprep.subr.bf16.mxu0 0
        %736 = vmatpush1.bf16.msra.mxu0 %v715
        %737 = vmatprep.subr.bf16.mxu0 0
        %738 = vmatpush1.bf16.msra.mxu0 %v716
        %739 = vmatprep.subr.bf16.mxu0 0
        %740 = vmatpush1.bf16.msra.mxu0 %v717
        %741 = vmatprep.subr.bf16.mxu0 0
        %742 = vmatpush1.bf16.msra.mxu0 %v718
        %743 = vmatprep.subr.bf16.mxu0 0
        %744 = vmatpush1.bf16.msra.mxu0 0
        %745 = vmatprep.subr.bf16.mxu0 0
        %746 = vmatpush1.bf16.msra.mxu0 0
        %747 = vmatprep.subr.bf16.mxu0 0
        %748 = vmatpush1.bf16.msra.mxu0 0
        %749 = vmatprep.subr.bf16.mxu0 0
        %750 = vmatpush1.bf16.msra.mxu0 0
        %751 = vmatprep.subr.bf16.mxu0 0
        %752 = vmatpush1.bf16.msra.mxu0 0
        %753 = vmatprep.subr.bf16.mxu0 0
        %754 = vmatpush1.bf16.msra.mxu0 0
        %755 = vmatprep.subr.bf16.mxu0 0
        %756 = vmatpush1.bf16.msra.mxu0 0
        %757 = vmatprep.subr.bf16.mxu0 0
        %758 = vmatpush1.bf16.msra.mxu0 0
        %759 = vmatprep.mubr.bf16.mxu0 0
        %760 = vmatmul.mubr.bf16.gmra.mrb[0].mxu0 %v647
        %v761 = vpop.f32.mrb[0].mxu0
        %v762 = vadd.f32 0.0, %v761
        %v763 = vpop.f32.mrb[0].mxu0
        %v764 = vpop.f32.mrb[0].mxu0
        %v765 = vadd.f32 0.0, %v764
        %v766 = vpop.f32.mrb[0].mxu0
        %767 = vmatprep.mubr.bf16.mxu0 0
        %768 = vmatmul.mubr.bf16.gmra.mrb[0].mxu0 %v648
        %v769 = vpop.f32.mrb[0].mxu0
        %v770 = vadd.f32 0.0, %v769
        %v771 = vpop.f32.mrb[0].mxu0
        %v772 = vpop.f32.mrb[0].mxu0
        %v773 = vadd.f32 0.0, %v772
        %v774 = vpop.f32.mrb[0].mxu0
        %775 = vmatprep.mubr.bf16.mxu0 0
        %776 = vmatmul.mubr.bf16.gmra.mrb[0].mxu0 %v649
        %v777 = vpop.f32.mrb[0].mxu0
        %v778 = vadd.f32 0.0, %v777
        %v779 = vpop.f32.mrb[0].mxu0
        %v780 = vpop.f32.mrb[0].mxu0
        %v781 = vadd.f32 0.0, %v780
        %v782 = vpop.f32.mrb[0].mxu0
        %783 = vmatprep.mubr.bf16.mxu0 0
        %784 = vmatmul.mubr.bf16.gmra.mrb[0].mxu0 %v650
        %v785 = vpop.f32.mrb[0].mxu0
        %v786 = vadd.f32 0.0, %v785
        %v787 = vpop.f32.mrb[0].mxu0
        %v788 = vpop.f32.mrb[0].mxu0
        %v789 = vadd.f32 0.0, %v788
        %v790 = vpop.f32.mrb[0].mxu0
        %791 = vmatprep.mubr.bf16.mxu0 0
        %792 = vmatmul.mubr.bf16.gmra.mrb[0].mxu0 %v651
        %v793 = vpop.f32.mrb[0].mxu0
        %v794 = vadd.f32 0.0, %v793
        %v795 = vpop.f32.mrb[0].mxu0
        %v796 = vpop.f32.mrb[0].mxu0
        %v797 = vadd.f32 0.0, %v796
        %v798 = vpop.f32.mrb[0].mxu0
        %799 = vmatprep.mubr.bf16.mxu0 0
        %800 = vmatmul.mubr.bf16.gmra.mrb[0].mxu0 %v652
        %v801 = vpop.f32.mrb[0].mxu0
        %v802 = vadd.f32 0.0, %v801
        %v803 = vpop.f32.mrb[0].mxu0
        %v804 = vpop.f32.mrb[0].mxu0
        %v805 = vadd.f32 0.0, %v804
        %v806 = vpop.f32.mrb[0].mxu0
        %807 = vmatprep.mubr.bf16.mxu0 0
        %808 = vmatmul.mubr.bf16.gmra.mrb[0].mxu0 %v653
        %v809 = vpop.f32.mrb[0].mxu0
        %v810 = vadd.f32 0.0, %v809
        %v811 = vpop.f32.mrb[0].mxu0
        %v812 = vpop.f32.mrb[0].mxu0
        %v813 = vadd.f32 0.0, %v812
        %v814 = vpop.f32.mrb[0].mxu0
        %815 = vmatprep.mubr.bf16.mxu0 0
        %816 = vmatmul.mubr.bf16.gmra.mrb[0].mxu0 %v654
        %v817 = vpop.f32.mrb[0].mxu0
        %v818 = vadd.f32 0.0, %v817
        %v819 = vpop.f32.mrb[0].mxu0
        %v820 = vpop.f32.mrb[0].mxu0
        %v821 = vadd.f32 0.0, %v820
        %v822 = vpop.f32.mrb[0].mxu0
        %823 = vmatprep.mubr.bf16.mxu0 0
        %824 = vmatmul.mubr.bf16.gmra.mrb[0].mxu0 %v655
        %v825 = vpop.f32.mrb[0].mxu0
        %v826 = vadd.f32 0.0, %v825
        %v827 = vpop.f32.mrb[0].mxu0
        %v828 = vpop.f32.mrb[0].mxu0
        %v829 = vadd.f32 0.0, %v828
        %v830 = vpop.f32.mrb[0].mxu0
        %831 = vmatprep.mubr.bf16.mxu0 0
        %832 = vmatmul.mubr.bf16.gmra.mrb[0].mxu0 %v656
        %v833 = vpop.f32.mrb[0].mxu0
        %v834 = vadd.f32 0.0, %v833
        %v835 = vpop.f32.mrb[0].mxu0
        %v836 = vpop.f32.mrb[0].mxu0
        %v837 = vadd.f32 0.0, %v836
        %v838 = vpop.f32.mrb[0].mxu0
        %839 = vmatprep.mubr.bf16.mxu0 0
        %840 = vmatmul.mubr.bf16.gmra.mrb[0].mxu0 %v657
        %v841 = vpop.f32.mrb[0].mxu0
        %v842 = vadd.f32 0.0, %v841
        %v843 = vpop.f32.mrb[0].mxu0
        %v844 = vpop.f32.mrb[0].mxu0
        %v845 = vadd.f32 0.0, %v844
        %v846 = vpop.f32.mrb[0].mxu0
        %847 = vmatprep.mubr.bf16.mxu0 0
        %848 = vmatmul.mubr.bf16.gmra.mrb[0].mxu0 %v658
        %v849 = vpop.f32.mrb[0].mxu0
        %v850 = vadd.f32 0.0, %v849
        %v851 = vpop.f32.mrb[0].mxu0
        %v852 = vpop.f32.mrb[0].mxu0
        %v853 = vadd.f32 0.0, %v852
        %v854 = vpop.f32.mrb[0].mxu0
        %855 = vmatprep.mubr.bf16.mxu0 0
        %856 = vmatmul.mubr.bf16.gmra.mrb[0].mxu0 %v659
        %v857 = vpop.f32.mrb[0].mxu0
        %v858 = vadd.f32 0.0, %v857
        %v859 = vpop.f32.mrb[0].mxu0
        %v860 = vpop.f32.mrb[0].mxu0
        %v861 = vadd.f32 0.0, %v860
        %v862 = vpop.f32.mrb[0].mxu0
        %863 = vmatprep.mubr.bf16.mxu0 0
        %864 = vmatmul.mubr.bf16.gmra.mrb[0].mxu0 %v660
        %v865 = vpop.f32.mrb[0].mxu0
        %v866 = vadd.f32 0.0, %v865
        %v867 = vpop.f32.mrb[0].mxu0
        %v868 = vpop.f32.mrb[0].mxu0
        %v869 = vadd.f32 0.0, %v868
        %v870 = vpop.f32.mrb[0].mxu0
        %871 = vmatprep.mubr.bf16.mxu0 0
        %872 = vmatmul.mubr.bf16.gmra.mrb[0].mxu0 %v661
        %v873 = vpop.f32.mrb[0].mxu0
        %v874 = vadd.f32 0.0, %v873
        %v875 = vpop.f32.mrb[0].mxu0
        %v876 = vpop.f32.mrb[0].mxu0
        %v877 = vadd.f32 0.0, %v876
        %v878 = vpop.f32.mrb[0].mxu0
        %879 = vmatprep.mubr.bf16.mxu0 0
        %880 = vmatmul.mubr.bf16.gmra.mrb[0].mxu0 %v662
        %v881 = vpop.f32.mrb[0].mxu0
        %v882 = vadd.f32 0.0, %v881
        %v883 = vpop.f32.mrb[0].mxu0
        %v884 = vpop.f32.mrb[0].mxu0
        %v885 = vadd.f32 0.0, %v884
        %v886 = vpop.f32.mrb[0].mxu0
        %887 = vdwg.mxu0
        %v888 = vpack.c.bf16 %v765, %v762
        %v889 = vpack.c.bf16 %v773, %v770
        %v890 = vpack.c.bf16 %v781, %v778
        %v891 = vpack.c.bf16 %v789, %v786
        %v892 = vpack.c.bf16 %v797, %v794
        %v893 = vpack.c.bf16 %v805, %v802
        %v894 = vpack.c.bf16 %v813, %v810
        %v895 = vpack.c.bf16 %v821, %v818
        %v896 = vpack.c.bf16 %v829, %v826
        %v897 = vpack.c.bf16 %v837, %v834
        %v898 = vpack.c.bf16 %v845, %v842
        %v899 = vpack.c.bf16 %v853, %v850
        %v900 = vpack.c.bf16 %v861, %v858
        %v901 = vpack.c.bf16 %v869, %v866
        %v902 = vpack.c.bf16 %v877, %v874
        %v903 = vpack.c.bf16 %v885, %v882
        %904 = vst [vmem:[#allocation2] sm:$0xff] %v888
        %905 = vst [vmem:[#allocation2 + $0x8] sm:$0xff] %v889
        %906 = vst [vmem:[#allocation2 + $0x10] sm:$0xff] %v890
        %907 = vst [vmem:[#allocation2 + $0x18] sm:$0xff] %v891
        %908 = vst [vmem:[#allocation2 + $0x20] sm:$0xff] %v892
        %909 = vst [vmem:[#allocation2 + $0x28] sm:$0xff] %v893
        %910 = vst [vmem:[#allocation2 + $0x30] sm:$0xff] %v894
        %911 = vst [vmem:[#allocation2 + $0x38] sm:$0xff] %v895
        %912 = vst [vmem:[#allocation2 + $0x40] sm:$0xff] %v896
        %913 = vst [vmem:[#allocation2 + $0x48] sm:$0xff] %v897
        %914 = vst [vmem:[#allocation2 + $0x50] sm:$0xff] %v898
        %915 = vst [vmem:[#allocation2 + $0x58] sm:$0xff] %v899
        %916 = vst [vmem:[#allocation2 + $0x60] sm:$0xff] %v900
        %917 = vst [vmem:[#allocation2 + $0x68] sm:$0xff] %v901
        %918 = vst [vmem:[#allocation2 + $0x70] sm:$0xff] %v902
        %919 = vst [vmem:[#allocation2 + $0x78] sm:$0xff] %v903
      $region52: #{_lambda_.1} parent=43 // pred_fallthru
        _
      %s920 = smul.u32 %s22, 128
      %s921 = sshra.s32 %s920, 3
      %s922 = sand.u32 %s920, 7
      %s923 = smul.u32 %s921, 2
      %s924 = smul.addr %s923, 4
      %s925 = scalar_lea.vmem %s0, %s924
      %v926 = vld [vmem:[%s925] sm:$0xff]
      %v927 = vld [vmem:[%s925 + $0x8] sm:$0xff]
      %v928 = vld [vmem:[%s925 + $0x10] sm:$0xff]
      %v929 = vld [vmem:[%s925 + $0x18] sm:$0xff]
      %v930 = vld [vmem:[%s925 + $0x20] sm:$0xff]
      %v931 = vld [vmem:[%s925 + $0x28] sm:$0xff]
      %v932 = vld [vmem:[%s925 + $0x30] sm:$0xff]
      %v933 = vld [vmem:[%s925 + $0x38] sm:$0xff]
      %v934 = vld [vmem:[%s925 + $0x40] sm:$0xff]
      %v935 = vld [vmem:[%s925 + $0x48] sm:$0xff]
      %v936 = vld [vmem:[%s925 + $0x50] sm:$0xff]
      %v937 = vld [vmem:[%s925 + $0x58] sm:$0xff]
      %v938 = vld [vmem:[%s925 + $0x60] sm:$0xff]
      %v939 = vld [vmem:[%s925 + $0x68] sm:$0xff]
      %v940 = vld [vmem:[%s925 + $0x70] sm:$0xff]
      %v941 = vld [vmem:[%s925 + $0x78] sm:$0xff]
      %v942 = vld [vmem:[#allocation2] sm:$0xff]
      %v943 = vld [vmem:[#allocation2 + $0x8] sm:$0xff]
      %v944 = vld [vmem:[#allocation2 + $0x10] sm:$0xff]
      %v945 = vld [vmem:[#allocation2 + $0x18] sm:$0xff]
      %v946 = vld [vmem:[#allocation2 + $0x20] sm:$0xff]
      %v947 = vld [vmem:[#allocation2 + $0x28] sm:$0xff]
      %v948 = vld [vmem:[#allocation2 + $0x30] sm:$0xff]
      %v949 = vld [vmem:[#allocation2 + $0x38] sm:$0xff]
      %v950 = vld [vmem:[#allocation2 + $0x40] sm:$0xff]
      %v951 = vld [vmem:[#allocation2 + $0x48] sm:$0xff]
      %v952 = vld [vmem:[#allocation2 + $0x50] sm:$0xff]
      %v953 = vld [vmem:[#allocation2 + $0x58] sm:$0xff]
      %v954 = vld [vmem:[#allocation2 + $0x60] sm:$0xff]
      %v955 = vld [vmem:[#allocation2 + $0x68] sm:$0xff]
      %v956 = vld [vmem:[#allocation2 + $0x70] sm:$0xff]
      %v957 = vld [vmem:[#allocation2 + $0x78] sm:$0xff]
      %v974 = vunpack.c.l.b16 %v926
      %v975 = vunpack.c.h.b16 %v926
      %v976 = vunpack.c.l.b16 %v927
      %v977 = vunpack.c.h.b16 %v927
      %v978 = vunpack.c.l.b16 %v928
      %v979 = vunpack.c.h.b16 %v928
      %v980 = vunpack.c.l.b16 %v929
      %v981 = vunpack.c.h.b16 %v929
      %v982 = vunpack.c.l.b16 %v930
      %v983 = vunpack.c.h.b16 %v930
      %v984 = vunpack.c.l.b16 %v931
      %v985 = vunpack.c.h.b16 %v931
      %v986 = vunpack.c.l.b16 %v932
      %v987 = vunpack.c.h.b16 %v932
      %v988 = vunpack.c.l.b16 %v933
      %v989 = vunpack.c.h.b16 %v933
      %v990 = vunpack.c.l.b16 %v934
      %v991 = vunpack.c.h.b16 %v934
      %v992 = vunpack.c.l.b16 %v935
      %v993 = vunpack.c.h.b16 %v935
      %v994 = vunpack.c.l.b16 %v936
      %v995 = vunpack.c.h.b16 %v936
      %v996 = vunpack.c.l.b16 %v937
      %v997 = vunpack.c.h.b16 %v937
      %v998 = vunpack.c.l.b16 %v938
      %v999 = vunpack.c.h.b16 %v938
      %v1000 = vunpack.c.l.b16 %v939
      %v1001 = vunpack.c.h.b16 %v939
      %v1002 = vunpack.c.l.b16 %v940
      %v1003 = vunpack.c.h.b16 %v940
      %v1004 = vunpack.c.l.b16 %v941
      %v1005 = vunpack.c.h.b16 %v941
      %v1006 = vpack.c.b16 %v976, %v974
      %v1007 = vpack.c.b16 %v977, %v975
      %v1008 = vpack.c.b16 %v980, %v978
      %v1009 = vpack.c.b16 %v981, %v979
      %v1010 = vpack.c.b16 %v984, %v982
      %v1011 = vpack.c.b16 %v985, %v983
      %v1012 = vpack.c.b16 %v988, %v986
      %v1013 = vpack.c.b16 %v989, %v987
      %v1014 = vpack.c.b16 %v992, %v990
      %v1015 = vpack.c.b16 %v993, %v991
      %v1016 = vpack.c.b16 %v996, %v994
      %v1017 = vpack.c.b16 %v997, %v995
      %v1018 = vpack.c.b16 %v1000, %v998
      %v1019 = vpack.c.b16 %v1001, %v999
      %v1020 = vpack.c.b16 %v1004, %v1002
      %v1021 = vpack.c.b16 %v1005, %v1003
      %1038 = vmatprep.subr.bf16.mxu0 0
      %1039 = vmatpush1.bf16.msra.mxu0 %v942
      %1040 = vmatprep.subr.bf16.mxu0 0
      %1041 = vmatpush1.bf16.msra.mxu0 %v943
      %1042 = vmatprep.subr.bf16.mxu0 0
      %1043 = vmatpush1.bf16.msra.mxu0 %v944
      %1044 = vmatprep.subr.bf16.mxu0 0
      %1045 = vmatpush1.bf16.msra.mxu0 %v945
      %1046 = vmatprep.subr.bf16.mxu0 0
      %1047 = vmatpush1.bf16.msra.mxu0 %v946
      %1048 = vmatprep.subr.bf16.mxu0 0
      %1049 = vmatpush1.bf16.msra.mxu0 %v947
      %1050 = vmatprep.subr.bf16.mxu0 0
      %1051 = vmatpush1.bf16.msra.mxu0 %v948
      %1052 = vmatprep.subr.bf16.mxu0 0
      %1053 = vmatpush1.bf16.msra.mxu0 %v949
      %1054 = vmatprep.subr.bf16.mxu0 0
      %1055 = vmatpush1.bf16.msra.mxu0 %v950
      %1056 = vmatprep.subr.bf16.mxu0 0
      %1057 = vmatpush1.bf16.msra.mxu0 %v951
      %1058 = vmatprep.subr.bf16.mxu0 0
      %1059 = vmatpush1.bf16.msra.mxu0 %v952
      %1060 = vmatprep.subr.bf16.mxu0 0
      %1061 = vmatpush1.bf16.msra.mxu0 %v953
      %1062 = vmatprep.subr.bf16.mxu0 0
      %1063 = vmatpush1.bf16.msra.mxu0 %v954
      %1064 = vmatprep.subr.bf16.mxu0 0
      %1065 = vmatpush1.bf16.msra.mxu0 %v955
      %1066 = vmatprep.subr.bf16.mxu0 0
      %1067 = vmatpush1.bf16.msra.mxu0 %v956
      %1068 = vmatprep.subr.bf16.mxu0 0
      %1069 = vmatpush1.bf16.msra.mxu0 %v957
      %1070 = vmatprep.mubr.bf16.mxu0 %v1007
      %1071 = vmatmul.mubr.bf16.gmra.mrb[0].mxu0 %v1006
      %v1072 = vpop.f32.mrb[0].mxu0
      %v1073 = vadd.f32 0.0, %v1072
      %v1074 = vpop.f32.mrb[0].mxu0
      %v1075 = vpop.f32.mrb[0].mxu0
      %v1076 = vadd.f32 0.0, %v1075
      %v1077 = vpop.f32.mrb[0].mxu0
      %1078 = vmatprep.mubr.bf16.mxu0 %v1009
      %1079 = vmatmul.mubr.bf16.gmra.mrb[0].mxu0 %v1008
      %v1080 = vpop.f32.mrb[0].mxu0
      %v1081 = vadd.f32 0.0, %v1080
      %v1082 = vpop.f32.mrb[0].mxu0
      %v1083 = vpop.f32.mrb[0].mxu0
      %v1084 = vadd.f32 0.0, %v1083
      %v1085 = vpop.f32.mrb[0].mxu0
      %1086 = vmatprep.mubr.bf16.mxu0 %v1011
      %1087 = vmatmul.mubr.bf16.gmra.mrb[0].mxu0 %v1010
      %v1088 = vpop.f32.mrb[0].mxu0
      %v1089 = vadd.f32 0.0, %v1088
      %v1090 = vpop.f32.mrb[0].mxu0
      %v1091 = vpop.f32.mrb[0].mxu0
      %v1092 = vadd.f32 0.0, %v1091
      %v1093 = vpop.f32.mrb[0].mxu0
      %1094 = vmatprep.mubr.bf16.mxu0 %v1013
      %1095 = vmatmul.mubr.bf16.gmra.mrb[0].mxu0 %v1012
      %v1096 = vpop.f32.mrb[0].mxu0
      %v1097 = vadd.f32 0.0, %v1096
      %v1098 = vpop.f32.mrb[0].mxu0
      %v1099 = vpop.f32.mrb[0].mxu0
      %v1100 = vadd.f32 0.0, %v1099
      %v1101 = vpop.f32.mrb[0].mxu0
      %1102 = vmatprep.mubr.bf16.mxu0 %v1015
      %1103 = vmatmul.mubr.bf16.gmra.mrb[0].mxu0 %v1014
      %v1104 = vpop.f32.mrb[0].mxu0
      %v1105 = vadd.f32 0.0, %v1104
      %v1106 = vpop.f32.mrb[0].mxu0
      %v1107 = vpop.f32.mrb[0].mxu0
      %v1108 = vadd.f32 0.0, %v1107
      %v1109 = vpop.f32.mrb[0].mxu0
      %1110 = vmatprep.mubr.bf16.mxu0 %v1017
      %1111 = vmatmul.mubr.bf16.gmra.mrb[0].mxu0 %v1016
      %v1112 = vpop.f32.mrb[0].mxu0
      %v1113 = vadd.f32 0.0, %v1112
      %v1114 = vpop.f32.mrb[0].mxu0
      %v1115 = vpop.f32.mrb[0].mxu0
      %v1116 = vadd.f32 0.0, %v1115
      %v1117 = vpop.f32.mrb[0].mxu0
      %1118 = vmatprep.mubr.bf16.mxu0 %v1019
      %1119 = vmatmul.mubr.bf16.gmra.mrb[0].mxu0 %v1018
      %v1120 = vpop.f32.mrb[0].mxu0
      %v1121 = vadd.f32 0.0, %v1120
      %v1122 = vpop.f32.mrb[0].mxu0
      %v1123 = vpop.f32.mrb[0].mxu0
      %v1124 = vadd.f32 0.0, %v1123
      %v1125 = vpop.f32.mrb[0].mxu0
      %1126 = vmatprep.mubr.bf16.mxu0 %v1021
      %1127 = vmatmul.mubr.bf16.gmra.mrb[0].mxu0 %v1020
      %v1128 = vpop.f32.mrb[0].mxu0
      %v1129 = vadd.f32 0.0, %v1128
      %v1130 = vpop.f32.mrb[0].mxu0
      %v1131 = vpop.f32.mrb[0].mxu0
      %v1132 = vadd.f32 0.0, %v1131
      %v1133 = vpop.f32.mrb[0].mxu0
      %1134 = vdwg.mxu0
      // Predicated region
      $region53: #{_lambda_.1} parent=43 // pred_check
        %p1135 = pneg %p251
      $region54: #{_lambda_.1} parent=43 // pred_check_branch
        %1137 = sbr.rel (%p1135) target = $region56
      $region55: #{_lambda_.1} parent=43 // pred_region
        %v1138 = vld [vmem:[%s3] sm:$0x1]
        %v1140 = vlaneseq
        %v1141 = vshrl.u32 %v1140, 7
        %v1142 = vsub.s32 0, %v1141
        %v1143 = vrot.slane %v1138, %v1142
        %v1145 = vadd.f32 %v1073, %v1143
        %v1146 = vadd.f32 %v1076, %v1143
        %v1147 = vadd.f32 %v1081, %v1143
        %v1148 = vadd.f32 %v1084, %v1143
        %v1149 = vadd.f32 %v1089, %v1143
        %v1150 = vadd.f32 %v1092, %v1143
        %v1151 = vadd.f32 %v1097, %v1143
        %v1152 = vadd.f32 %v1100, %v1143
        %v1153 = vadd.f32 %v1105, %v1143
        %v1154 = vadd.f32 %v1108, %v1143
        %v1155 = vadd.f32 %v1113, %v1143
        %v1156 = vadd.f32 %v1116, %v1143
        %v1157 = vadd.f32 %v1121, %v1143
        %v1158 = vadd.f32 %v1124, %v1143
        %v1159 = vadd.f32 %v1129, %v1143
        %v1160 = vadd.f32 %v1132, %v1143
        %v1161 = vmax.f32 %v1145, 0.0
        %v1162 = vmax.f32 %v1146, 0.0
        %v1163 = vmax.f32 %v1147, 0.0
        %v1164 = vmax.f32 %v1148, 0.0
        %v1165 = vmax.f32 %v1149, 0.0
        %v1166 = vmax.f32 %v1150, 0.0
        %v1167 = vmax.f32 %v1151, 0.0
        %v1168 = vmax.f32 %v1152, 0.0
        %v1169 = vmax.f32 %v1153, 0.0
        %v1170 = vmax.f32 %v1154, 0.0
        %v1171 = vmax.f32 %v1155, 0.0
        %v1172 = vmax.f32 %v1156, 0.0
        %v1173 = vmax.f32 %v1157, 0.0
        %v1174 = vmax.f32 %v1158, 0.0
        %v1175 = vmax.f32 %v1159, 0.0
        %v1176 = vmax.f32 %v1160, 0.0
        %v1177 = vpack.c.bf16 %v1162, %v1161
        %v1178 = vpack.c.bf16 %v1164, %v1163
        %v1179 = vpack.c.bf16 %v1166, %v1165
        %v1180 = vpack.c.bf16 %v1168, %v1167
        %v1181 = vpack.c.bf16 %v1170, %v1169
        %v1182 = vpack.c.bf16 %v1172, %v1171
        %v1183 = vpack.c.bf16 %v1174, %v1173
        %v1184 = vpack.c.bf16 %v1176, %v1175
        %s1185 = sshra.s32 %s920, 4
        %s1186 = sand.u32 %s920, 15
        %s1187 = smul.addr %s1185, 8
        %s1188 = scalar_lea.vmem [#allocation3], %s1187
        %1189 = vst [vmem:[%s1188] sm:$0xff] %v1177
        %1190 = vst [vmem:[%s1188 + $0x8] sm:$0xff] %v1178
        %1191 = vst [vmem:[%s1188 + $0x10] sm:$0xff] %v1179
        %1192 = vst [vmem:[%s1188 + $0x18] sm:$0xff] %v1180
        %1193 = vst [vmem:[%s1188 + $0x20] sm:$0xff] %v1181
        %1194 = vst [vmem:[%s1188 + $0x28] sm:$0xff] %v1182
        %1195 = vst [vmem:[%s1188 + $0x30] sm:$0xff] %v1183
        %1196 = vst [vmem:[%s1188 + $0x38] sm:$0xff] %v1184
      $region56: #{_lambda_.1} parent=43 // pred_fallthru
        _
      // Predicated region
      $region57: #{_lambda_.1} parent=43 // pred_check
        %p1197 = pneg %p642
      $region58: #{_lambda_.1} parent=43 // pred_check_branch
        %1199 = sbr.rel (%p1197) target = $region60
      $region59: #{_lambda_.1} parent=43 // pred_region
        %v1200 = vld [vmem:[%s5] sm:$0x1]
        %v1202 = vlaneseq
        %v1203 = vshrl.u32 %v1202, 7
        %v1204 = vsub.s32 0, %v1203
        %v1205 = vrot.slane %v1200, %v1204
        %v1207 = vadd.f32 %v1073, %v1205
        %v1208 = vadd.f32 %v1076, %v1205
        %v1209 = vadd.f32 %v1081, %v1205
        %v1210 = vadd.f32 %v1084, %v1205
        %v1211 = vadd.f32 %v1089, %v1205
        %v1212 = vadd.f32 %v1092, %v1205
        %v1213 = vadd.f32 %v1097, %v1205
        %v1214 = vadd.f32 %v1100, %v1205
        %v1215 = vadd.f32 %v1105, %v1205
        %v1216 = vadd.f32 %v1108, %v1205
        %v1217 = vadd.f32 %v1113, %v1205
        %v1218 = vadd.f32 %v1116, %v1205
        %v1219 = vadd.f32 %v1121, %v1205
        %v1220 = vadd.f32 %v1124, %v1205
        %v1221 = vadd.f32 %v1129, %v1205
        %v1222 = vadd.f32 %v1132, %v1205
        %1223 = vst [vmem:[%s247] sm:$0xff] %v1207
        %1224 = vst [vmem:[%s247 + $0x8] sm:$0xff] %v1208
        %1225 = vst [vmem:[%s247 + $0x10] sm:$0xff] %v1209
        %1226 = vst [vmem:[%s247 + $0x18] sm:$0xff] %v1210
        %1227 = vst [vmem:[%s247 + $0x20] sm:$0xff] %v1211
        %1228 = vst [vmem:[%s247 + $0x28] sm:$0xff] %v1212
        %1229 = vst [vmem:[%s247 + $0x30] sm:$0xff] %v1213
        %1230 = vst [vmem:[%s247 + $0x38] sm:$0xff] %v1214
        %1231 = vst [vmem:[%s247 + $0x40] sm:$0xff] %v1215
        %1232 = vst [vmem:[%s247 + $0x48] sm:$0xff] %v1216
        %1233 = vst [vmem:[%s247 + $0x50] sm:$0xff] %v1217
        %1234 = vst [vmem:[%s247 + $0x58] sm:$0xff] %v1218
        %1235 = vst [vmem:[%s247 + $0x60] sm:$0xff] %v1219
        %1236 = vst [vmem:[%s247 + $0x68] sm:$0xff] %v1220
        %1237 = vst [vmem:[%s247 + $0x70] sm:$0xff] %v1221
        %1238 = vst [vmem:[%s247 + $0x78] sm:$0xff] %v1222
      $region60: #{_lambda_.1} parent=43 // pred_fallthru
        _
      %s1239 = smul.u32 %s22, %s21
      %s1240 = smul.u32 16, %s1239
      %p1241 = scmp.lt.s32.totalorder %s1240, 31
      %s1242 = scalar_select %p1241, %s1240, 31
      %s1243 = smul.addr %s1242, 8
      %s1244 = scalar_lea.vmem %s6, %s1243
      // Predicated region
      $region61: #{_lambda_.1} parent=43 // pred_check
        %p1245 = pneg %p175
      $region62: #{_lambda_.1} parent=43 // pred_check_branch
        %1247 = sbr.rel (%p1245) target = $region64
      $region63: #{_lambda_.1} parent=43 // pred_region
        %s1248 = smul.u32 %s22, %s21
        %s1249 = smul.u32 16, %s1248
      $region64: #{_lambda_.1} parent=43 // pred_fallthru
        _
    $region44: #{_lambda_.1} parent=5 // pred_fallthru
      _
    %p1250 = scmp.le.s32.totalorder 2, %s12
    // Predicated region
    $region65: #{_lambda_.1} parent=5 // pred_check
      %p1251 = pneg %p1250
    $region66: #{_lambda_.1} parent=5 // pred_check_branch
      %1253 = sbr.rel (%p1251) target = $region68
    $region67: #{_lambda_.1} parent=5 // pred_region
      %s1254 = ssub.s32 %s12, 2
      // Predicated region
      $region69: #{_lambda_.1} parent=67 // pred_check
        %p1255 = pneg %p181
      $region70: #{_lambda_.1} parent=67 // pred_check_branch
        %1257 = sbr.rel (%p1255) target = $region72
      $region71: #{_lambda_.1} parent=67 // pred_region
        %s1258 = smul.u32 %s24, %s23
        %s1259 = smul.u32 16, %s1258
        %p1260 = scmp.lt.s32.totalorder %s1259, 31
        %s1261 = scalar_select %p1260, %s1259, 31
        %s1262 = smul.addr %s1261, 8
        %s1263 = scalar_lea.vmem %s6, %s1262
      $region72: #{_lambda_.1} parent=67 // pred_fallthru
        _
    $region68: #{_lambda_.1} parent=5 // pred_fallthru
      _
  $region6: #{_lambda_.1} parent=0 // loop_footer
    %s16 = sadd.s32 1, %s12
  $region7: #{_lambda_.1} parent=0 // loop_footer_branch
    %11 = sbr.rel target = $region3
  $region8: #{_lambda_.1} parent=0 // loop_exit
    _

</llo_original>
